<compile_context>
chip_gen: v5e
topology: v5e:2x2
jax: 0.10.0
libtpu: 0.0.40
codegen_flags: <defaults>
</compile_context>

<pallas_src>
import functools

import jax
import jax.numpy as jnp
from jax.experimental import pallas as pl
from jax.experimental.pallas import tpu as pltpu

LN_EPS = 1e-5
_SQRT2 = 1.4142135623730951
_MIN_ROWS = 16  # bf16 sublane packing; also satisfies the 8-row block rule


def _round_up(x, m):
    return (x + m - 1) // m * m


def _cdiv(a, b):
    return -(-a // b)


def _gelu_exact(x):
    # matches torch nn.GELU() (erf formulation)
    # TODO(synk): optional tanh-approx GELU would route to the EUP slot, but it
    # no longer bit-tracks torch's exact GELU, so it stays off by default.
    return 0.5 * x * (1.0 + jax.lax.erf(x / _SQRT2))


def task_aware_kernel(
    pf_ref, vf_ref, tf_ref,
    wp_ref, wv_ref, wt_ref,
    w1_ref, w2_ref,
    vecf_ref, vech_ref,
    out_ref,
    *, hidden, eps,
):
    # small per-feature row vectors, packed into two (8, lanes) f32 slabs
    bp, bv, bt = vecf_ref[0:1, :], vecf_ref[1:2, :], vecf_ref[2:3, :]
    b2, g2, beta2 = vecf_ref[3:4, :], vecf_ref[4:5, :], vecf_ref[5:6, :]
    b1, g1, beta1 = vech_ref[0:1, :], vech_ref[1:2, :], vech_ref[2:3, :]

    def norm(x, d):
        # one-pass LayerNorm statistics (no affine), f32
        s = jnp.sum(x, axis=-1, keepdims=True)
        sq = jnp.sum(x * x, axis=-1, keepdims=True)
        mu = s * (1.0 / d)
        var = jnp.maximum(sq * (1.0 / d) - mu * mu, 0.0)
        return (x - mu) * jax.lax.rsqrt(var + eps)

    def proj(x_ref, w_ref, b):
        y = jnp.dot(x_ref[...], w_ref[...], preferred_element_type=jnp.float32) + b
        # LN affine of the projections is folded into w1 / b1 at prep time.
        return norm(y, float(y.shape[-1])).astype(w1_ref.dtype)

    p = proj(pf_ref, wp_ref, bp)
    v = proj(vf_ref, wv_ref, bv)
    t = proj(tf_ref, wt_ref, bt)

    # detector layer 1 as ONE matmul over the stacked [3F, Hp] weight.  Each
    # concat segment is a whole group of 128 lanes (F is a multiple of 128 in
    # the intended config), so this is a layout join, not a cross-lane shuffle.
    x = jnp.concatenate([p, v, t], axis=-1)
    h = jnp.dot(x, w1_ref[...], preferred_element_type=jnp.float32) + b1

    # LayerNorm over the zero-padded hidden dim.  w1 columns and b1 beyond
    # `hidden` are zero, so h's padded lanes are exactly 0 and no lane mask is
    # needed; g1/beta1 are zero-padded so the padded lanes of the affine
    # result are exactly 0 as well (and w2's padded rows are zero anyway).
    s = jnp.sum(h, axis=-1, keepdims=True)
    sq = jnp.sum(h * h, axis=-1, keepdims=True)
    mu = s * (1.0 / hidden)
    var = jnp.maximum(sq * (1.0 / hidden) - mu * mu, 0.0)
    hn = (h - mu) * jax.lax.rsqrt(var + eps) * g1 + beta1
    hg = _gelu_exact(hn).astype(w2_ref.dtype)

    # detector layer 2 + final LayerNorm (with affine)
    y = jnp.dot(hg, w2_ref[...], preferred_element_type=jnp.float32) + b2
    y = norm(y, float(y.shape[-1])) * g2 + beta2
    out_ref[...] = y.astype(out_ref.dtype)


def _pick_row_tile(M, row_tile):
    n_tiles = max(1, _cdiv(M, row_tile))
    # v7x shards the "parallel" grid axis across its 2 TensorCores: avoid a
    # single giant grid step when there is enough work to split in two.
    if n_tiles == 1 and M > 2 * _MIN_ROWS:
        n_tiles = 2
    return _round_up(_cdiv(M, n_tiles), _MIN_ROWS)


def task_aware_redundancy_extractor(point_feat, view_feat, text_feat, kparams,
                                    *, row_tile=1024, out_dtype=jnp.bfloat16):
    """Fused forward pass.  `kparams` comes from prepare_kernel_params()."""
    lead = point_feat.shape[:-1]
    Dp = point_feat.shape[-1]
    Dv = view_feat.shape[-1]
    Dt = text_feat.shape[-1]
    F = kparams["wp"].shape[-1]
    Hp = kparams["w1"].shape[-1]
    hidden = int(kparams["hidden"])  # static python int

    pf = point_feat.reshape(-1, Dp).astype(jnp.bfloat16)
    vf = view_feat.reshape(-1, Dv).astype(jnp.bfloat16)
    tf = text_feat.reshape(-1, Dt).astype(jnp.bfloat16)
    M = pf.shape[0]

    rt = _pick_row_tile(M, row_tile)
    Mp = _round_up(M, rt)
    if Mp != M:
        pad = Mp - M
        pf = jnp.pad(pf, ((0, pad), (0, 0)))
        vf = jnp.pad(vf, ((0, pad), (0, 0)))
        tf = jnp.pad(tf, ((0, pad), (0, 0)))

    weight_names = ["wp", "wv", "wt", "w1", "w2", "vecf", "vech"]
    weights = [kparams[n] for n in weight_names]

    def row_spec(d):
        return pl.BlockSpec((rt, d), lambda i: (i, 0))

    def full_spec(a):
        return pl.BlockSpec(a.shape, lambda i: (0, 0))

    # computed VMEM budget: double-buffered row tiles + weights + rough f32
    # intermediates + fixed margin.  Leaves headroom on v7x's 64 MiB per TC.
    wbytes = sum(int(w.size) * w.dtype.itemsize for w in weights)
    io_bytes = 2 * rt * ((Dp + Dv + Dt) * 2 + F * jnp.dtype(out_dtype).itemsize)
    temp_bytes = rt * (26 * F + 12 * Hp)
    vmem_limit = int(2 * wbytes + io_bytes + temp_bytes + (8 << 20))

    kernel = functools.partial(task_aware_kernel, hidden=hidden, eps=LN_EPS)

    out = pl.pallas_call(
        kernel,
        out_shape=jax.ShapeDtypeStruct((Mp, F), out_dtype),
        grid_spec=pltpu.PrefetchScalarGridSpec(
            num_scalar_prefetch=0,
            grid=(Mp // rt,),
            in_specs=[row_spec(Dp), row_spec(Dv), row_spec(Dt)]
                     + [full_spec(w) for w in weights],
            out_specs=pl.BlockSpec((rt, F), lambda i: (i, 0)),
        ),
        compiler_params=pltpu.CompilerParams(
            dimension_semantics=("parallel",),
            vmem_limit_bytes=vmem_limit),
    )(pf, vf, tf, *weights)

    # padded tail rows contain LN-of-zeros garbage and MUST be sliced off here.
    return out[:M].reshape(*lead, F)


def prepare_kernel_params(raw):
    """Folds / pads / packs / casts raw (PyTorch-shaped) parameters.

    raw: wp (Dp,F), bp (F,), gp (F,), betap (F,)  [same for v, t],
         w1 (3F,H), b1/g1/beta1 (H,), w2 (H,F), b2/g2/beta2 (F,)   — all f32.
    """
    F = raw["wp"].shape[-1]
    H = raw["w1"].shape[-1]
    Hp = _round_up(H, 128)          # pad hidden dim to full 128-lane vregs

    w1 = raw["w1"]
    w1a_o, w1b_o, w1c_o = w1[:F], w1[F:2 * F], w1[2 * F:]

    # fold the projection LayerNorm affines (gamma/beta) into w1 / b1 (exact)
    b1_f = (raw["b1"]
            + raw["betap"] @ w1a_o
            + raw["betav"] @ w1b_o
            + raw["betat"] @ w1c_o)
    w1_f = jnp.concatenate([raw["gp"][:, None] * w1a_o,
                            raw["gv"][:, None] * w1b_o,
                            raw["gt"][:, None] * w1c_o], axis=0)   # (3F, H)

    def col_pad(x2d, total):
        return jnp.pad(x2d, ((0, 0), (0, total - x2d.shape[-1])))

    def pack_rows(rows, lanes):
        mat = jnp.stack([jnp.pad(r, (0, lanes - r.shape[0])) for r in rows])
        return jnp.pad(mat, ((0, 8 - mat.shape[0]), (0, 0)))   # pad to 8 rows

    bf16 = jnp.bfloat16
    # packed small vectors (f32): rows 0..5 of vecf = bp,bv,bt,b2,g2,beta2
    vecf = pack_rows([raw["bp"], raw["bv"], raw["bt"],
                      raw["b2"], raw["g2"], raw["beta2"]], F)
    # rows 0..2 of vech = b1 (folded), g1, beta1 — zero-padded to Hp lanes
    vech = pack_rows([b1_f, raw["g1"], raw["beta1"]], Hp)

    return dict(
        wp=raw["wp"].astype(bf16),
        wv=raw["wv"].astype(bf16),
        wt=raw["wt"].astype(bf16),
        w1=col_pad(w1_f, Hp).astype(bf16),
        w2=jnp.pad(raw["w2"], ((0, Hp - H), (0, 0))).astype(bf16),
        vecf=vecf.astype(jnp.float32),
        vech=vech.astype(jnp.float32),
        hidden=H,
    )


def make_params(key, point_dim, view_dim, text_dim, fusion_dim):
    """Deterministic synthetic parameters (shapes match the PyTorch module)."""
    H = fusion_dim * 3 // 16
    keys = jax.random.split(key, 10)

    def linear(k, din, dout):
        kw, kb = jax.random.split(k)
        scale = 1.0 / jnp.sqrt(din)
        w = jax.random.uniform(kw, (din, dout), jnp.float32, -scale, scale)
        b = jax.random.uniform(kb, (dout,), jnp.float32, -scale, scale)
        return w, b

    def ln_params(k, d):
        kg, kb = jax.random.split(k)
        g = 1.0 + 0.1 * jax.random.normal(kg, (d,), jnp.float32)
        b = 0.1 * jax.random.normal(kb, (d,), jnp.float32)
        return g, b

    params = {}
    for idx, (name, din) in enumerate((("p", point_dim), ("v", view_dim), ("t", text_dim))):
        w, b = linear(keys[idx], din, fusion_dim)
        g, beta = ln_params(keys[idx + 3], fusion_dim)
        params[f"w{name}"] = w
        params[f"b{name}"] = b
        params[f"g{name}"] = g
        params[f"beta{name}"] = beta
    w1, b1 = linear(keys[6], fusion_dim * 3, H)
    g1, beta1 = ln_params(keys[7], H)
    w2, b2 = linear(keys[8], H, fusion_dim)
    g2, beta2 = ln_params(keys[9], fusion_dim)
    params.update(w1=w1, b1=b1, g1=g1, beta1=beta1,
                  w2=w2, b2=b2, g2=g2, beta2=beta2)
    return params


def reference_forward(point_feat, view_feat, text_feat, raw):
    """Plain-JAX f32 reference replicating the PyTorch forward semantics."""
    def ln(x, g, b):
        mu = jnp.mean(x, axis=-1, keepdims=True)
        var = jnp.mean(jnp.square(x - mu), axis=-1, keepdims=True)
        return (x - mu) / jnp.sqrt(var + LN_EPS) * g + b

    p = ln(point_feat @ raw["wp"] + raw["bp"], raw["gp"], raw["betap"])
    v = ln(view_feat @ raw["wv"] + raw["bv"], raw["gv"], raw["betav"])
    t = ln(text_feat @ raw["wt"] + raw["bt"], raw["gt"], raw["betat"])
    x = jnp.concatenate([p, v, t], axis=-1)
    h = ln(x @ raw["w1"] + raw["b1"], raw["g1"], raw["beta1"])
    h = _gelu_exact(h)
    return ln(h @ raw["w2"] + raw["b2"], raw["g2"], raw["beta2"])


if __name__ == "__main__":
    # small shapes consistent with the module's forward
    B, N = 2, 8                        # batch, tokens  -> M = 16 rows
    point_dim, view_dim, text_dim = 32, 48, 64
    fusion_dim = 128                   # lane-dense output; H = 3*128//16 = 24
    # hidden_dim of the module constructor is unused by forward (as in torch)

    key = jax.random.PRNGKey(0)
    kp, kv, kt, kw = jax.random.split(key, 4)
    point_feat = jax.random.normal(kp, (B, N, point_dim), jnp.float32)
    view_feat = jax.random.normal(kv, (B, N, view_dim), jnp.float32)
    text_feat = jax.random.normal(kt, (B, N, text_dim), jnp.float32)

    raw = make_params(kw, point_dim, view_dim, text_dim, fusion_dim)
    kparams = prepare_kernel_params(raw)

    out = task_aware_redundancy_extractor(point_feat, view_feat, text_feat, kparams)
    out = jax.block_until_ready(out)

    ref = reference_forward(point_feat, view_feat, text_feat, raw)
    assert out.shape == (B, N, fusion_dim)
    # bf16 matmul operands + bf16 output (f32 accumulation/LN) -> loose tol
    assert jnp.allclose(out.astype(jnp.float32), ref, atol=5e-2, rtol=5e-2), \
        "mismatch vs reference"
    print("KERNEL_OK")
</pallas_src>

<mosaic_0001>
module attributes {stable_mosaic.version = 11 : i64} {
  func.func @task_aware_kernel(%arg0: i32, %arg1: memref<16x32xbf16, #tpu.memory_space<vmem>>, %arg2: memref<16x48xbf16, #tpu.memory_space<vmem>>, %arg3: memref<16x64xbf16, #tpu.memory_space<vmem>>, %arg4: memref<32x128xbf16, #tpu.memory_space<vmem>>, %arg5: memref<48x128xbf16, #tpu.memory_space<vmem>>, %arg6: memref<64x128xbf16, #tpu.memory_space<vmem>>, %arg7: memref<384x128xbf16, #tpu.memory_space<vmem>>, %arg8: memref<128x128xbf16, #tpu.memory_space<vmem>>, %arg9: memref<8x128xf32, #tpu.memory_space<vmem>>, %arg10: memref<8x128xf32, #tpu.memory_space<vmem>>, %arg11: memref<16x128xbf16, #tpu.memory_space<vmem>>) attributes {dimension_semantics = [#tpu.dimension_semantics<parallel>], iteration_bounds = array<i64: 1>, scalar_prefetch = 0 : i64, scratch_operands = 0 : i64, tpu.core_type = #tpu.core_type<tc>, window_params = [{transform_indices = @transform_0, window_bounds = array<i64: 16, 32>}, {transform_indices = @transform_1, window_bounds = array<i64: 16, 48>}, {transform_indices = @transform_2, window_bounds = array<i64: 16, 64>}, {pipeline_mode = #tpu.pipeline_mode<synchronous>, transform_indices = @transform_3, window_bounds = array<i64: 32, 128>}, {pipeline_mode = #tpu.pipeline_mode<synchronous>, transform_indices = @transform_4, window_bounds = array<i64: 48, 128>}, {pipeline_mode = #tpu.pipeline_mode<synchronous>, transform_indices = @transform_5, window_bounds = array<i64: 64, 128>}, {pipeline_mode = #tpu.pipeline_mode<synchronous>, transform_indices = @transform_6, window_bounds = array<i64: 384, 128>}, {pipeline_mode = #tpu.pipeline_mode<synchronous>, transform_indices = @transform_7, window_bounds = array<i64: 128, 128>}, {pipeline_mode = #tpu.pipeline_mode<synchronous>, transform_indices = @transform_8, window_bounds = array<i64: 8, 128>}, {pipeline_mode = #tpu.pipeline_mode<synchronous>, transform_indices = @transform_9, window_bounds = array<i64: 8, 128>}, {transform_indices = @transform_10, window_bounds = array<i64: 16, 128>}]} {
    %c0 = arith.constant 0 : index
    %c0_0 = arith.constant 0 : index
    %0 = vector.load %arg9[%c0, %c0_0] : memref<8x128xf32, #tpu.memory_space<vmem>>, vector<1x128xf32>
    %c1 = arith.constant 1 : index
    %c0_1 = arith.constant 0 : index
    %1 = vector.load %arg9[%c1, %c0_1] : memref<8x128xf32, #tpu.memory_space<vmem>>, vector<1x128xf32>
    %c2 = arith.constant 2 : index
    %c0_2 = arith.constant 0 : index
    %2 = vector.load %arg9[%c2, %c0_2] : memref<8x128xf32, #tpu.memory_space<vmem>>, vector<1x128xf32>
    %c3 = arith.constant 3 : index
    %c0_3 = arith.constant 0 : index
    %3 = vector.load %arg9[%c3, %c0_3] : memref<8x128xf32, #tpu.memory_space<vmem>>, vector<1x128xf32>
    %c4 = arith.constant 4 : index
    %c0_4 = arith.constant 0 : index
    %4 = vector.load %arg9[%c4, %c0_4] : memref<8x128xf32, #tpu.memory_space<vmem>>, vector<1x128xf32>
    %c5 = arith.constant 5 : index
    %c0_5 = arith.constant 0 : index
    %5 = vector.load %arg9[%c5, %c0_5] : memref<8x128xf32, #tpu.memory_space<vmem>>, vector<1x128xf32>
    %c0_6 = arith.constant 0 : index
    %c0_7 = arith.constant 0 : index
    %6 = vector.load %arg10[%c0_6, %c0_7] : memref<8x128xf32, #tpu.memory_space<vmem>>, vector<1x128xf32>
    %c1_8 = arith.constant 1 : index
    %c0_9 = arith.constant 0 : index
    %7 = vector.load %arg10[%c1_8, %c0_9] : memref<8x128xf32, #tpu.memory_space<vmem>>, vector<1x128xf32>
    %c2_10 = arith.constant 2 : index
    %c0_11 = arith.constant 0 : index
    %8 = vector.load %arg10[%c2_10, %c0_11] : memref<8x128xf32, #tpu.memory_space<vmem>>, vector<1x128xf32>
    %c0_12 = arith.constant 0 : index
    %c0_13 = arith.constant 0 : index
    %9 = vector.load %arg1[%c0_12, %c0_13] : memref<16x32xbf16, #tpu.memory_space<vmem>>, vector<16x32xbf16>
    %c0_14 = arith.constant 0 : index
    %c0_15 = arith.constant 0 : index
    %10 = vector.load %arg4[%c0_14, %c0_15] : memref<32x128xbf16, #tpu.memory_space<vmem>>, vector<32x128xbf16>
    %cst = arith.constant dense<0.000000e+00> : vector<16x128xf32>
    %11 = tpu.matmul %9, %10, %cst {dimension_numbers = #tpu.dot_dimension_numbers<[1], [0], [0], [1], [0, 0, 1, 1], [], []>} : vector<16x32xbf16>, vector<32x128xbf16>, vector<16x128xf32> -> vector<16x128xf32>
    %12 = vector.broadcast %0 : vector<1x128xf32> to vector<16x128xf32>
    %13 = arith.addf %11, %12 : vector<16x128xf32>
    %cst_16 = arith.constant dense<0.000000e+00> : vector<16xf32>
    %14 = vector.multi_reduction <add>, %13, %cst_16 [1] : vector<16x128xf32> to vector<16xf32>
    %15 = vector.shape_cast %14 : vector<16xf32> to vector<16x1xf32>
    %16 = arith.mulf %13, %13 : vector<16x128xf32>
    %cst_17 = arith.constant dense<0.000000e+00> : vector<16xf32>
    %17 = vector.multi_reduction <add>, %16, %cst_17 [1] : vector<16x128xf32> to vector<16xf32>
    %18 = vector.shape_cast %17 : vector<16xf32> to vector<16x1xf32>
    %cst_18 = arith.constant 7.812500e-03 : f32
    %19 = vector.broadcast %cst_18 : f32 to vector<16x1xf32>
    %20 = arith.mulf %15, %19 : vector<16x1xf32>
    %cst_19 = arith.constant 7.812500e-03 : f32
    %21 = vector.broadcast %cst_19 : f32 to vector<16x1xf32>
    %22 = arith.mulf %18, %21 : vector<16x1xf32>
    %23 = arith.mulf %20, %20 : vector<16x1xf32>
    %24 = arith.subf %22, %23 : vector<16x1xf32>
    %cst_20 = arith.constant 0.000000e+00 : f32
    %25 = vector.broadcast %cst_20 : f32 to vector<16x1xf32>
    %26 = arith.maximumf %24, %25 : vector<16x1xf32>
    %27 = vector.broadcast %20 : vector<16x1xf32> to vector<16x128xf32>
    %28 = arith.subf %13, %27 : vector<16x128xf32>
    %cst_21 = arith.constant 9.99999974E-6 : f32
    %29 = vector.broadcast %cst_21 : f32 to vector<16x1xf32>
    %30 = arith.addf %26, %29 : vector<16x1xf32>
    %31 = math.rsqrt %30 : vector<16x1xf32>
    %32 = vector.broadcast %31 : vector<16x1xf32> to vector<16x128xf32>
    %33 = arith.mulf %28, %32 : vector<16x128xf32>
    %34 = arith.truncf %33 : vector<16x128xf32> to vector<16x128xbf16>
    %c0_22 = arith.constant 0 : index
    %c0_23 = arith.constant 0 : index
    %35 = vector.load %arg2[%c0_22, %c0_23] : memref<16x48xbf16, #tpu.memory_space<vmem>>, vector<16x48xbf16>
    %c0_24 = arith.constant 0 : index
    %c0_25 = arith.constant 0 : index
    %36 = vector.load %arg5[%c0_24, %c0_25] : memref<48x128xbf16, #tpu.memory_space<vmem>>, vector<48x128xbf16>
    %cst_26 = arith.constant dense<0.000000e+00> : vector<16x128xf32>
    %37 = tpu.matmul %35, %36, %cst_26 {dimension_numbers = #tpu.dot_dimension_numbers<[1], [0], [0], [1], [0, 0, 1, 1], [], []>} : vector<16x48xbf16>, vector<48x128xbf16>, vector<16x128xf32> -> vector<16x128xf32>
    %38 = vector.broadcast %1 : vector<1x128xf32> to vector<16x128xf32>
    %39 = arith.addf %37, %38 : vector<16x128xf32>
    %cst_27 = arith.constant dense<0.000000e+00> : vector<16xf32>
    %40 = vector.multi_reduction <add>, %39, %cst_27 [1] : vector<16x128xf32> to vector<16xf32>
    %41 = vector.shape_cast %40 : vector<16xf32> to vector<16x1xf32>
    %42 = arith.mulf %39, %39 : vector<16x128xf32>
    %cst_28 = arith.constant dense<0.000000e+00> : vector<16xf32>
    %43 = vector.multi_reduction <add>, %42, %cst_28 [1] : vector<16x128xf32> to vector<16xf32>
    %44 = vector.shape_cast %43 : vector<16xf32> to vector<16x1xf32>
    %cst_29 = arith.constant 7.812500e-03 : f32
    %45 = vector.broadcast %cst_29 : f32 to vector<16x1xf32>
    %46 = arith.mulf %41, %45 : vector<16x1xf32>
    %cst_30 = arith.constant 7.812500e-03 : f32
    %47 = vector.broadcast %cst_30 : f32 to vector<16x1xf32>
    %48 = arith.mulf %44, %47 : vector<16x1xf32>
    %49 = arith.mulf %46, %46 : vector<16x1xf32>
    %50 = arith.subf %48, %49 : vector<16x1xf32>
    %cst_31 = arith.constant 0.000000e+00 : f32
    %51 = vector.broadcast %cst_31 : f32 to vector<16x1xf32>
    %52 = arith.maximumf %50, %51 : vector<16x1xf32>
    %53 = vector.broadcast %46 : vector<16x1xf32> to vector<16x128xf32>
    %54 = arith.subf %39, %53 : vector<16x128xf32>
    %cst_32 = arith.constant 9.99999974E-6 : f32
    %55 = vector.broadcast %cst_32 : f32 to vector<16x1xf32>
    %56 = arith.addf %52, %55 : vector<16x1xf32>
    %57 = math.rsqrt %56 : vector<16x1xf32>
    %58 = vector.broadcast %57 : vector<16x1xf32> to vector<16x128xf32>
    %59 = arith.mulf %54, %58 : vector<16x128xf32>
    %60 = arith.truncf %59 : vector<16x128xf32> to vector<16x128xbf16>
    %c0_33 = arith.constant 0 : index
    %c0_34 = arith.constant 0 : index
    %61 = vector.load %arg3[%c0_33, %c0_34] : memref<16x64xbf16, #tpu.memory_space<vmem>>, vector<16x64xbf16>
    %c0_35 = arith.constant 0 : index
    %c0_36 = arith.constant 0 : index
    %62 = vector.load %arg6[%c0_35, %c0_36] : memref<64x128xbf16, #tpu.memory_space<vmem>>, vector<64x128xbf16>
    %cst_37 = arith.constant dense<0.000000e+00> : vector<16x128xf32>
    %63 = tpu.matmul %61, %62, %cst_37 {dimension_numbers = #tpu.dot_dimension_numbers<[1], [0], [0], [1], [0, 0, 1, 1], [], []>} : vector<16x64xbf16>, vector<64x128xbf16>, vector<16x128xf32> -> vector<16x128xf32>
    %64 = vector.broadcast %2 : vector<1x128xf32> to vector<16x128xf32>
    %65 = arith.addf %63, %64 : vector<16x128xf32>
    %cst_38 = arith.constant dense<0.000000e+00> : vector<16xf32>
    %66 = vector.multi_reduction <add>, %65, %cst_38 [1] : vector<16x128xf32> to vector<16xf32>
    %67 = vector.shape_cast %66 : vector<16xf32> to vector<16x1xf32>
    %68 = arith.mulf %65, %65 : vector<16x128xf32>
    %cst_39 = arith.constant dense<0.000000e+00> : vector<16xf32>
    %69 = vector.multi_reduction <add>, %68, %cst_39 [1] : vector<16x128xf32> to vector<16xf32>
    %70 = vector.shape_cast %69 : vector<16xf32> to vector<16x1xf32>
    %cst_40 = arith.constant 7.812500e-03 : f32
    %71 = vector.broadcast %cst_40 : f32 to vector<16x1xf32>
    %72 = arith.mulf %67, %71 : vector<16x1xf32>
    %cst_41 = arith.constant 7.812500e-03 : f32
    %73 = vector.broadcast %cst_41 : f32 to vector<16x1xf32>
    %74 = arith.mulf %70, %73 : vector<16x1xf32>
    %75 = arith.mulf %72, %72 : vector<16x1xf32>
    %76 = arith.subf %74, %75 : vector<16x1xf32>
    %cst_42 = arith.constant 0.000000e+00 : f32
    %77 = vector.broadcast %cst_42 : f32 to vector<16x1xf32>
    %78 = arith.maximumf %76, %77 : vector<16x1xf32>
    %79 = vector.broadcast %72 : vector<16x1xf32> to vector<16x128xf32>
    %80 = arith.subf %65, %79 : vector<16x128xf32>
    %cst_43 = arith.constant 9.99999974E-6 : f32
    %81 = vector.broadcast %cst_43 : f32 to vector<16x1xf32>
    %82 = arith.addf %78, %81 : vector<16x1xf32>
    %83 = math.rsqrt %82 : vector<16x1xf32>
    %84 = vector.broadcast %83 : vector<16x1xf32> to vector<16x128xf32>
    %85 = arith.mulf %80, %84 : vector<16x128xf32>
    %86 = arith.truncf %85 : vector<16x128xf32> to vector<16x128xbf16>
    %87 = tpu.concatenate %34, %60, %86 in 1 : vector<16x128xbf16>, vector<16x128xbf16>, vector<16x128xbf16> -> vector<16x384xbf16>
    %c0_44 = arith.constant 0 : index
    %c0_45 = arith.constant 0 : index
    %88 = vector.load %arg7[%c0_44, %c0_45] : memref<384x128xbf16, #tpu.memory_space<vmem>>, vector<384x128xbf16>
    %cst_46 = arith.constant dense<0.000000e+00> : vector<16x128xf32>
    %89 = tpu.matmul %87, %88, %cst_46 {dimension_numbers = #tpu.dot_dimension_numbers<[1], [0], [0], [1], [0, 0, 1, 1], [], []>} : vector<16x384xbf16>, vector<384x128xbf16>, vector<16x128xf32> -> vector<16x128xf32>
    %90 = vector.broadcast %6 : vector<1x128xf32> to vector<16x128xf32>
    %91 = arith.addf %89, %90 : vector<16x128xf32>
    %cst_47 = arith.constant dense<0.000000e+00> : vector<16xf32>
    %92 = vector.multi_reduction <add>, %91, %cst_47 [1] : vector<16x128xf32> to vector<16xf32>
    %93 = vector.shape_cast %92 : vector<16xf32> to vector<16x1xf32>
    %94 = arith.mulf %91, %91 : vector<16x128xf32>
    %cst_48 = arith.constant dense<0.000000e+00> : vector<16xf32>
    %95 = vector.multi_reduction <add>, %94, %cst_48 [1] : vector<16x128xf32> to vector<16xf32>
    %96 = vector.shape_cast %95 : vector<16xf32> to vector<16x1xf32>
    %cst_49 = arith.constant 0.0416666679 : f32
    %97 = vector.broadcast %cst_49 : f32 to vector<16x1xf32>
    %98 = arith.mulf %93, %97 : vector<16x1xf32>
    %cst_50 = arith.constant 0.0416666679 : f32
    %99 = vector.broadcast %cst_50 : f32 to vector<16x1xf32>
    %100 = arith.mulf %96, %99 : vector<16x1xf32>
    %101 = arith.mulf %98, %98 : vector<16x1xf32>
    %102 = arith.subf %100, %101 : vector<16x1xf32>
    %cst_51 = arith.constant 0.000000e+00 : f32
    %103 = vector.broadcast %cst_51 : f32 to vector<16x1xf32>
    %104 = arith.maximumf %102, %103 : vector<16x1xf32>
    %105 = vector.broadcast %98 : vector<16x1xf32> to vector<16x128xf32>
    %106 = arith.subf %91, %105 : vector<16x128xf32>
    %cst_52 = arith.constant 9.99999974E-6 : f32
    %107 = vector.broadcast %cst_52 : f32 to vector<16x1xf32>
    %108 = arith.addf %104, %107 : vector<16x1xf32>
    %109 = math.rsqrt %108 : vector<16x1xf32>
    %110 = vector.broadcast %109 : vector<16x1xf32> to vector<16x128xf32>
    %111 = arith.mulf %106, %110 : vector<16x128xf32>
    %112 = vector.broadcast %7 : vector<1x128xf32> to vector<16x128xf32>
    %113 = arith.mulf %111, %112 : vector<16x128xf32>
    %114 = vector.broadcast %8 : vector<1x128xf32> to vector<16x128xf32>
    %115 = arith.addf %113, %114 : vector<16x128xf32>
    %cst_53 = arith.constant 5.000000e-01 : f32
    %116 = vector.broadcast %cst_53 : f32 to vector<16x128xf32>
    %117 = arith.mulf %116, %115 : vector<16x128xf32>
    %cst_54 = arith.constant 1.41421354 : f32
    %118 = vector.broadcast %cst_54 : f32 to vector<16x128xf32>
    %119 = arith.divf %115, %118 : vector<16x128xf32>
    %120 = math.erf %119 : vector<16x128xf32>
    %cst_55 = arith.constant 1.000000e+00 : f32
    %121 = vector.broadcast %cst_55 : f32 to vector<16x128xf32>
    %122 = arith.addf %121, %120 : vector<16x128xf32>
    %123 = arith.mulf %117, %122 : vector<16x128xf32>
    %124 = arith.truncf %123 : vector<16x128xf32> to vector<16x128xbf16>
    %c0_56 = arith.constant 0 : index
    %c0_57 = arith.constant 0 : index
    %125 = vector.load %arg8[%c0_56, %c0_57] : memref<128x128xbf16, #tpu.memory_space<vmem>>, vector<128x128xbf16>
    %cst_58 = arith.constant dense<0.000000e+00> : vector<16x128xf32>
    %126 = tpu.matmul %124, %125, %cst_58 {dimension_numbers = #tpu.dot_dimension_numbers<[1], [0], [0], [1], [0, 0, 1, 1], [], []>} : vector<16x128xbf16>, vector<128x128xbf16>, vector<16x128xf32> -> vector<16x128xf32>
    %127 = vector.broadcast %3 : vector<1x128xf32> to vector<16x128xf32>
    %128 = arith.addf %126, %127 : vector<16x128xf32>
    %cst_59 = arith.constant dense<0.000000e+00> : vector<16xf32>
    %129 = vector.multi_reduction <add>, %128, %cst_59 [1] : vector<16x128xf32> to vector<16xf32>
    %130 = vector.shape_cast %129 : vector<16xf32> to vector<16x1xf32>
    %131 = arith.mulf %128, %128 : vector<16x128xf32>
    %cst_60 = arith.constant dense<0.000000e+00> : vector<16xf32>
    %132 = vector.multi_reduction <add>, %131, %cst_60 [1] : vector<16x128xf32> to vector<16xf32>
    %133 = vector.shape_cast %132 : vector<16xf32> to vector<16x1xf32>
    %cst_61 = arith.constant 7.812500e-03 : f32
    %134 = vector.broadcast %cst_61 : f32 to vector<16x1xf32>
    %135 = arith.mulf %130, %134 : vector<16x1xf32>
    %cst_62 = arith.constant 7.812500e-03 : f32
    %136 = vector.broadcast %cst_62 : f32 to vector<16x1xf32>
    %137 = arith.mulf %133, %136 : vector<16x1xf32>
    %138 = arith.mulf %135, %135 : vector<16x1xf32>
    %139 = arith.subf %137, %138 : vector<16x1xf32>
    %cst_63 = arith.constant 0.000000e+00 : f32
    %140 = vector.broadcast %cst_63 : f32 to vector<16x1xf32>
    %141 = arith.maximumf %139, %140 : vector<16x1xf32>
    %142 = vector.broadcast %135 : vector<16x1xf32> to vector<16x128xf32>
    %143 = arith.subf %128, %142 : vector<16x128xf32>
    %cst_64 = arith.constant 9.99999974E-6 : f32
    %144 = vector.broadcast %cst_64 : f32 to vector<16x1xf32>
    %145 = arith.addf %141, %144 : vector<16x1xf32>
    %146 = math.rsqrt %145 : vector<16x1xf32>
    %147 = vector.broadcast %146 : vector<16x1xf32> to vector<16x128xf32>
    %148 = arith.mulf %143, %147 : vector<16x128xf32>
    %149 = vector.broadcast %4 : vector<1x128xf32> to vector<16x128xf32>
    %150 = arith.mulf %148, %149 : vector<16x128xf32>
    %151 = vector.broadcast %5 : vector<1x128xf32> to vector<16x128xf32>
    %152 = arith.addf %150, %151 : vector<16x128xf32>
    %153 = arith.truncf %152 : vector<16x128xf32> to vector<16x128xbf16>
    %c0_65 = arith.constant 0 : index
    %c0_66 = arith.constant 0 : index
    %154 = vector.load %arg11[%c0_65, %c0_66] : memref<16x128xbf16, #tpu.memory_space<vmem>>, vector<16x128xbf16>
    tpu.vector_store %arg11[%c0_65, %c0_66], %153 {strides = array<i32>} : memref<16x128xbf16, #tpu.memory_space<vmem>>, vector<16x128xbf16>,
    return
  }
  func.func @transform_0(%arg0: i32) -> (i32, i32) {
    %c0_i32 = arith.constant 0 : i32
    %c0_i32_0 = arith.constant 0 : i32
    return %arg0, %c0_i32 : i32, i32
  }
  func.func @transform_1(%arg0: i32) -> (i32, i32) {
    %c0_i32 = arith.constant 0 : i32
    %c0_i32_0 = arith.constant 0 : i32
    return %arg0, %c0_i32 : i32, i32
  }
  func.func @transform_2(%arg0: i32) -> (i32, i32) {
    %c0_i32 = arith.constant 0 : i32
    %c0_i32_0 = arith.constant 0 : i32
    return %arg0, %c0_i32 : i32, i32
  }
  func.func @transform_3(%arg0: i32) -> (i32, i32) {
    %c0_i32 = arith.constant 0 : i32
    %c0_i32_0 = arith.constant 0 : i32
    %c0_i32_1 = arith.constant 0 : i32
    return %c0_i32, %c0_i32_0 : i32, i32
  }
  func.func @transform_4(%arg0: i32) -> (i32, i32) {
    %c0_i32 = arith.constant 0 : i32
    %c0_i32_0 = arith.constant 0 : i32
    %c0_i32_1 = arith.constant 0 : i32
    return %c0_i32, %c0_i32_0 : i32, i32
  }
  func.func @transform_5(%arg0: i32) -> (i32, i32) {
    %c0_i32 = arith.constant 0 : i32
    %c0_i32_0 = arith.constant 0 : i32
    %c0_i32_1 = arith.constant 0 : i32
    return %c0_i32, %c0_i32_0 : i32, i32
  }
  func.func @transform_6(%arg0: i32) -> (i32, i32) {
    %c0_i32 = arith.constant 0 : i32
    %c0_i32_0 = arith.constant 0 : i32
    %c0_i32_1 = arith.constant 0 : i32
    return %c0_i32, %c0_i32_0 : i32, i32
  }
  func.func @transform_7(%arg0: i32) -> (i32, i32) {
    %c0_i32 = arith.constant 0 : i32
    %c0_i32_0 = arith.constant 0 : i32
    %c0_i32_1 = arith.constant 0 : i32
    return %c0_i32, %c0_i32_0 : i32, i32
  }
  func.func @transform_8(%arg0: i32) -> (i32, i32) {
    %c0_i32 = arith.constant 0 : i32
    %c0_i32_0 = arith.constant 0 : i32
    %c0_i32_1 = arith.constant 0 : i32
    return %c0_i32, %c0_i32_0 : i32, i32
  }
  func.func @transform_9(%arg0: i32) -> (i32, i32) {
    %c0_i32 = arith.constant 0 : i32
    %c0_i32_0 = arith.constant 0 : i32
    %c0_i32_1 = arith.constant 0 : i32
    return %c0_i32, %c0_i32_0 : i32, i32
  }
  func.func @transform_10(%arg0: i32) -> (i32, i32) {
    %c0_i32 = arith.constant 0 : i32
    %c0_i32_0 = arith.constant 0 : i32
    return %arg0, %c0_i32 : i32, i32
  }
}

</mosaic_0001>

<llo_original>
// kernel: tpu_custom_call.1
$region0: #{tpu_custom_call.1}
  #allocation0 [shape = 'u32[]', space=smem, size = 0x4, offset = 0x4, fixed_abs, tag = 'smem constant byte address 0x4 - core index']
  #allocation1 [shape = 'u32[72,128]{1,0:T(1,128)}', space=vmem, size = 0x9000, scoped, tag = 'internal scratch']
  %s0 = inlined_call_operand.hbm [shape: bf16[16,32], index: 0, kind: input, shape index: {}]
  %s1 = inlined_call_operand.hbm [shape: bf16[16,48], index: 1, kind: input, shape index: {}]
  %s2 = inlined_call_operand.hbm [shape: bf16[16,64], index: 2, kind: input, shape index: {}]
  %s3 = inlined_call_operand.hbm [shape: bf16[32,128], index: 3, kind: input, shape index: {}]
  %s4 = inlined_call_operand.hbm [shape: bf16[48,128], index: 4, kind: input, shape index: {}]
  %s5 = inlined_call_operand.hbm [shape: bf16[64,128], index: 5, kind: input, shape index: {}]
  %s6 = inlined_call_operand.hbm [shape: bf16[384,128], index: 6, kind: input, shape index: {}]
  %s7 = inlined_call_operand.hbm [shape: bf16[128,128], index: 7, kind: input, shape index: {}]
  %s8 = inlined_call_operand.hbm [shape: f32[8,128], index: 8, kind: input, shape index: {}]
  %s9 = inlined_call_operand.vmem [shape: f32[8,128], index: 9, kind: input, shape index: {}]
  %s10 = inlined_call_operand.hbm [shape: bf16[16,128], index: 10, kind: output, shape index: {}]
  %s11 = sld [smem:[#allocation0]]
  $region86: #{tpu_custom_call.1} parent=0
    _
  %s13 = ssub.s32 1, %s11
  %s14 = scalar_select 0, %s13, %s11
  $region1: #{tpu_custom_call.1} parent=0
    #allocation2 [shape = 'u8[4096]{0}', space=vmem, size = 0x1000, scoped, tag = 'input window, operand 0, single buffered']
    #allocation3 [shape = 's32[1]{0}', space=sflag, size = 0x4, scoped, tag = 'scoped memory for tpu_custom_call.1']
    #allocation4 [shape = 's32[1]{0}', space=sflag, size = 0x4, scoped, tag = 'scoped memory for tpu_custom_call.1']
    #allocation5 [shape = 'u8[4096]{0}', space=vmem, size = 0x1000, scoped, tag = 'input window, operand 1, single buffered']
    #allocation6 [shape = 's32[1]{0}', space=sflag, size = 0x4, scoped, tag = 'scoped memory for tpu_custom_call.1']
    #allocation7 [shape = 'u8[4096]{0}', space=vmem, size = 0x1000, scoped, tag = 'input window, operand 2, single buffered']
    #allocation8 [shape = 'u8[8192]{0}', space=vmem, size = 0x2000, scoped, tag = 'input window, operand 3, single buffered']
    #allocation9 [shape = 's32[1]{0}', space=sflag, size = 0x4, scoped, tag = 'scoped memory for tpu_custom_call.1']
    #allocation10 [shape = 'u8[12288]{0}', space=vmem, size = 0x3000, scoped, tag = 'input window, operand 4, single buffered']
    #allocation11 [shape = 'u8[16384]{0}', space=vmem, size = 0x4000, scoped, tag = 'input window, operand 5, single buffered']
    #allocation12 [shape = 's32[1]{0}', space=sflag, size = 0x4, scoped, tag = 'scoped memory for tpu_custom_call.1']
    #allocation13 [shape = 'u8[98304]{0}', space=vmem, size = 0x18000, scoped, tag = 'input window, operand 6, single buffered']
    #allocation14 [shape = 'u8[32768]{0}', space=vmem, size = 0x8000, scoped, tag = 'input window, operand 7, single buffered']
    #allocation15 [shape = 's32[1]{0}', space=sflag, size = 0x4, scoped, tag = 'scoped memory for tpu_custom_call.1']
    #allocation16 [shape = 'u8[4096]{0}', space=vmem, size = 0x1000, scoped, tag = 'input window, operand 8, single buffered']
    #allocation17 [shape = 'u8[4096]{0}', space=vmem, size = 0x1000, scoped, tag = 'output window, operand 0, single buffered']
    %15 = vsyncpa [#allocation3], 0
    %16 = vsyncpa [#allocation6], 0
    %17 = vsyncpa [#allocation9], 0
    %18 = vsyncpa [#allocation12], 0
    %19 = vsyncpa [#allocation15], 0
    %20 = vsyncpa [#allocation4], 0
    // Predicated region
    $region2: #{tpu_custom_call.1} parent=1 // pred_check
      _
    $region3: #{tpu_custom_call.1} parent=1 // pred_check_branch
      %22 = sbr.rel (0) target = $region5
    $region4: #{tpu_custom_call.1} parent=1 // pred_region
      %24 = vsyncadd [#allocation3], 0
      %s25 = sshll.u32 %s0, 4
      %s26 = int_to_ptr.hbm [resolvable:$true] %s25
      %s27 = sshll.u32 [#allocation2], 4
      %s28 = int_to_ptr.vmem [resolvable:$true] %s27
      %33 = dma.hbm_to_vmem [thread:$0]  %s26, 128, %s28, [#allocation3], 64, 64, 4
    $region5: #{tpu_custom_call.1} parent=1 // pred_fallthru
      _
    // Predicated region
    $region6: #{tpu_custom_call.1} parent=1 // pred_check
      _
    $region7: #{tpu_custom_call.1} parent=1 // pred_check_branch
      %35 = sbr.rel (0) target = $region9
    $region8: #{tpu_custom_call.1} parent=1 // pred_region
      %37 = vsyncadd [#allocation6], 0
      %s38 = sshll.u32 %s1, 4
      %s39 = int_to_ptr.hbm [resolvable:$true] %s38
      %s40 = sshll.u32 [#allocation5], 4
      %s41 = int_to_ptr.vmem [resolvable:$true] %s40
      %46 = dma.hbm_to_vmem [thread:$0]  %s39, 128, %s41, [#allocation6], 64, 64, 4
    $region9: #{tpu_custom_call.1} parent=1 // pred_fallthru
      _
    // Predicated region
    $region10: #{tpu_custom_call.1} parent=1 // pred_check
      _
    $region11: #{tpu_custom_call.1} parent=1 // pred_check_branch
      %48 = sbr.rel (0) target = $region13
    $region12: #{tpu_custom_call.1} parent=1 // pred_region
      %50 = vsyncadd [#allocation6], 0
      %s51 = sshll.u32 %s2, 4
      %s52 = int_to_ptr.hbm [resolvable:$true] %s51
      %s53 = sshll.u32 [#allocation7], 4
      %s54 = int_to_ptr.vmem [resolvable:$true] %s53
      %59 = dma.hbm_to_vmem [thread:$0]  %s52, 128, %s54, [#allocation6], 64, 64, 4
    $region13: #{tpu_custom_call.1} parent=1 // pred_fallthru
      _
    // Predicated region
    $region14: #{tpu_custom_call.1} parent=1 // pred_check
      _
    $region15: #{tpu_custom_call.1} parent=1 // pred_check_branch
      %61 = sbr.rel (0) target = $region17
    $region16: #{tpu_custom_call.1} parent=1 // pred_region
      %63 = vsyncadd [#allocation9], 0
      %s64 = sshll.u32 %s3, 4
      %s65 = int_to_ptr.hbm [resolvable:$true] %s64
      %s66 = sshll.u32 [#allocation8], 4
      %s67 = int_to_ptr.vmem [resolvable:$true] %s66
      %72 = dma.hbm_to_vmem [thread:$0]  %s65, 256, %s67, [#allocation9], 64, 64, 4
    $region17: #{tpu_custom_call.1} parent=1 // pred_fallthru
      _
    // Predicated region
    $region18: #{tpu_custom_call.1} parent=1 // pred_check
      _
    $region19: #{tpu_custom_call.1} parent=1 // pred_check_branch
      %74 = sbr.rel (0) target = $region21
    $region20: #{tpu_custom_call.1} parent=1 // pred_region
      %76 = vsyncadd [#allocation9], 0
      %s77 = sshll.u32 %s4, 4
      %s78 = int_to_ptr.hbm [resolvable:$true] %s77
      %s79 = sshll.u32 [#allocation10], 4
      %s80 = int_to_ptr.vmem [resolvable:$true] %s79
      %85 = dma.hbm_to_vmem [thread:$0]  %s78, 384, %s80, [#allocation9], 64, 64, 4
    $region21: #{tpu_custom_call.1} parent=1 // pred_fallthru
      _
    // Predicated region
    $region22: #{tpu_custom_call.1} parent=1 // pred_check
      _
    $region23: #{tpu_custom_call.1} parent=1 // pred_check_branch
      %87 = sbr.rel (0) target = $region25
    $region24: #{tpu_custom_call.1} parent=1 // pred_region
      %89 = vsyncadd [#allocation12], 0
      %s90 = sshll.u32 %s5, 4
      %s91 = int_to_ptr.hbm [resolvable:$true] %s90
      %s92 = sshll.u32 [#allocation11], 4
      %s93 = int_to_ptr.vmem [resolvable:$true] %s92
      %98 = dma.hbm_to_vmem [thread:$0]  %s91, 512, %s93, [#allocation12], 64, 64, 4
    $region25: #{tpu_custom_call.1} parent=1 // pred_fallthru
      _
    // Predicated region
    $region26: #{tpu_custom_call.1} parent=1 // pred_check
      _
    $region27: #{tpu_custom_call.1} parent=1 // pred_check_branch
      %100 = sbr.rel (0) target = $region29
    $region28: #{tpu_custom_call.1} parent=1 // pred_region
      %102 = vsyncadd [#allocation12], 0
      %s103 = sshll.u32 %s6, 4
      %s104 = int_to_ptr.hbm [resolvable:$true] %s103
      %s105 = sshll.u32 [#allocation13], 4
      %s106 = int_to_ptr.vmem [resolvable:$true] %s105
      %111 = dma.hbm_to_vmem [thread:$0]  %s104, 3072, %s106, [#allocation12], 64, 64, 4
    $region29: #{tpu_custom_call.1} parent=1 // pred_fallthru
      _
    // Predicated region
    $region30: #{tpu_custom_call.1} parent=1 // pred_check
      _
    $region31: #{tpu_custom_call.1} parent=1 // pred_check_branch
      %113 = sbr.rel (0) target = $region33
    $region32: #{tpu_custom_call.1} parent=1 // pred_region
      %115 = vsyncadd [#allocation15], 0
      %s116 = sshll.u32 %s7, 4
      %s117 = int_to_ptr.hbm [resolvable:$true] %s116
      %s118 = sshll.u32 [#allocation14], 4
      %s119 = int_to_ptr.vmem [resolvable:$true] %s118
      %124 = dma.hbm_to_vmem [thread:$0]  %s117, 1024, %s119, [#allocation15], 64, 64, 4
    $region33: #{tpu_custom_call.1} parent=1 // pred_fallthru
      _
    // Predicated region
    $region34: #{tpu_custom_call.1} parent=1 // pred_check
      _
    $region35: #{tpu_custom_call.1} parent=1 // pred_check_branch
      %126 = sbr.rel (0) target = $region37
    $region36: #{tpu_custom_call.1} parent=1 // pred_region
      %128 = vsyncadd [#allocation15], 0
      %s130 = sshll.u32 %s8, 4
      %s131 = int_to_ptr.hbm [resolvable:$true] %s130
      %s132 = sshll.u32 [#allocation16], 4
      %s133 = int_to_ptr.vmem [resolvable:$true] %s132
      %135 = dma.hbm_to_vmem [thread:$0]  %s131, 128, %s133, [#allocation15]
    $region37: #{tpu_custom_call.1} parent=1 // pred_fallthru
      _
    // Predicated region
    $region38: #{tpu_custom_call.1} parent=1 // pred_check
      _
    $region39: #{tpu_custom_call.1} parent=1 // pred_check_branch
      %137 = sbr.rel (0) target = $region41
    $region40: #{tpu_custom_call.1} parent=1 // pred_region
      _
    $region41: #{tpu_custom_call.1} parent=1 // pred_fallthru
      _
    // Predicated region
    $region42: #{tpu_custom_call.1} parent=1 // pred_check
      _
    $region43: #{tpu_custom_call.1} parent=1 // pred_check_branch
      %139 = sbr.rel (0) target = $region45
    $region44: #{tpu_custom_call.1} parent=1 // pred_region
      %141 = dma.done [#allocation3], 128
    $region45: #{tpu_custom_call.1} parent=1 // pred_fallthru
      _
    // Predicated region
    $region46: #{tpu_custom_call.1} parent=1 // pred_check
      _
    $region47: #{tpu_custom_call.1} parent=1 // pred_check_branch
      %143 = sbr.rel (0) target = $region49
    $region48: #{tpu_custom_call.1} parent=1 // pred_region
      %145 = dma.done [#allocation6], 128
    $region49: #{tpu_custom_call.1} parent=1 // pred_fallthru
      _
    // Predicated region
    $region50: #{tpu_custom_call.1} parent=1 // pred_check
      _
    $region51: #{tpu_custom_call.1} parent=1 // pred_check_branch
      %147 = sbr.rel (0) target = $region53
    $region52: #{tpu_custom_call.1} parent=1 // pred_region
      %149 = dma.done [#allocation6], 128
    $region53: #{tpu_custom_call.1} parent=1 // pred_fallthru
      _
    // Predicated region
    $region54: #{tpu_custom_call.1} parent=1 // pred_check
      _
    $region55: #{tpu_custom_call.1} parent=1 // pred_check_branch
      %151 = sbr.rel (0) target = $region57
    $region56: #{tpu_custom_call.1} parent=1 // pred_region
      %153 = dma.done [#allocation9], 256
    $region57: #{tpu_custom_call.1} parent=1 // pred_fallthru
      _
    // Predicated region
    $region58: #{tpu_custom_call.1} parent=1 // pred_check
      _
    $region59: #{tpu_custom_call.1} parent=1 // pred_check_branch
      %155 = sbr.rel (0) target = $region61
    $region60: #{tpu_custom_call.1} parent=1 // pred_region
      %157 = dma.done [#allocation9], 384
    $region61: #{tpu_custom_call.1} parent=1 // pred_fallthru
      _
    // Predicated region
    $region62: #{tpu_custom_call.1} parent=1 // pred_check
      _
    $region63: #{tpu_custom_call.1} parent=1 // pred_check_branch
      %159 = sbr.rel (0) target = $region65
    $region64: #{tpu_custom_call.1} parent=1 // pred_region
      %161 = dma.done [#allocation12], 512
    $region65: #{tpu_custom_call.1} parent=1 // pred_fallthru
      _
    // Predicated region
    $region66: #{tpu_custom_call.1} parent=1 // pred_check
      _
    $region67: #{tpu_custom_call.1} parent=1 // pred_check_branch
      %163 = sbr.rel (0) target = $region69
    $region68: #{tpu_custom_call.1} parent=1 // pred_region
      %165 = dma.done [#allocation12], 3072
    $region69: #{tpu_custom_call.1} parent=1 // pred_fallthru
      _
    // Predicated region
    $region70: #{tpu_custom_call.1} parent=1 // pred_check
      _
    $region71: #{tpu_custom_call.1} parent=1 // pred_check_branch
      %167 = sbr.rel (0) target = $region73
    $region72: #{tpu_custom_call.1} parent=1 // pred_region
      %169 = dma.done [#allocation15], 1024
    $region73: #{tpu_custom_call.1} parent=1 // pred_fallthru
      _
    // Predicated region
    $region74: #{tpu_custom_call.1} parent=1 // pred_check
      _
    $region75: #{tpu_custom_call.1} parent=1 // pred_check_branch
      %171 = sbr.rel (0) target = $region77
    $region76: #{tpu_custom_call.1} parent=1 // pred_region
      %173 = dma.done [#allocation15], 128
    $region77: #{tpu_custom_call.1} parent=1 // pred_fallthru
      _
    %v175 = vld [vmem:[#allocation16] sm:$0x1]
    %v176 = vld [vmem:[#allocation16 + $0x1] sm:$0x1]
    %v177 = vld [vmem:[#allocation16 + $0x2] sm:$0x1]
    %v178 = vld [vmem:[#allocation16 + $0x3] sm:$0x1]
    %v179 = vld [vmem:[#allocation16 + $0x4] sm:$0x1]
    %v180 = vld [vmem:[#allocation16 + $0x5] sm:$0x1]
    %v181 = vld [vmem:[%s9] sm:$0x1]
    %v182 = vld [vmem:[%s9 + $0x1] sm:$0x1]
    %v183 = vld [vmem:[%s9 + $0x2] sm:$0x1]
    %v184 = vld [vmem:[#allocation2] sm:$0xf]
    %v185 = vld [vmem:[#allocation2 + $0x4] sm:$0xf]
    %v186 = vld [vmem:[#allocation8] sm:$0xf]
    %v187 = vld [vmem:[#allocation8 + $0x4] sm:$0xf]
    %v188 = vld [vmem:[#allocation8 + $0x8] sm:$0xf]
    %v189 = vld [vmem:[#allocation8 + $0xc] sm:$0xf]
    %v190 = vperm.slane %v175, 0
    %v193 = vunpack.c.l.b16 %v184
    %v194 = vunpack.c.l.b16 %v185
    %v195 = vpack.c.b16 %v194, %v193
    %v200 = vunpack.c.l.b16 %v186
    %v201 = vunpack.c.l.b16 %v187
    %v202 = vunpack.c.l.b16 %v188
    %v203 = vunpack.c.l.b16 %v189
    %v204 = vpack.c.b16 %v201, %v200
    %v205 = vpack.c.b16 %v203, %v202
    %vm208 = vcmask 261120
    %v210 = vsel %vm208, %v195, 0
    %212 = vmatpush.bf16.msra.mxu0 0
    %213 = vmatpush.bf16.msra.mxu0 0
    %214 = vmatpush.bf16.msra.mxu0 0
    %215 = vmatpush.bf16.msra.mxu0 0
    %216 = vmatpush.bf16.msra.mxu0 0
    %217 = vmatpush.bf16.msra.mxu0 0
    %218 = vmatpush.bf16.msra.mxu0 %v205
    %219 = vmatpush.bf16.msra.mxu0 %v204
    %220 = vmatmul.bf16.gmra.mxu0 %v210
    %v221 = vpop.f32.mrf.mxu0
    %v222 = vadd.f32 %v190, %v221
    %v223 = vpop.f32.mrf.mxu0
    %v224 = vadd.f32 %v190, %v223
    %225 = vdwg.mxu0
    %226 = vadd.xlane.f32.xlu0 %v222
    %v227 = vpop.xlane.xlu0 %226
    %228 = vadd.xlane.f32.xlu0 %v224
    %v229 = vpop.xlane.xlu0 %228
    %v230 = vmul.f32 %v222, %v222
    %v231 = vmul.f32 %v224, %v224
    %232 = vadd.xlane.f32.xlu0 %v230
    %v233 = vpop.xlane.xlu0 %232
    %234 = vadd.xlane.f32.xlu0 %v231
    %v235 = vpop.xlane.xlu0 %234
    %v236 = vmul.f32 %v227, 0.0078125
    %v237 = vmul.f32 %v229, 0.0078125
    %v238 = vmul.f32 %v233, 0.0078125
    %v239 = vmul.f32 %v235, 0.0078125
    %v240 = vmul.f32 %v236, %v236
    %v241 = vmul.f32 %v237, %v237
    %v242 = vsub.f32 %v238, %v240
    %v243 = vsub.f32 %v239, %v241
    %v244 = vmax.f32 %v242, 0.0
    %v245 = vmax.f32 %v243, 0.0
    %v246 = vsub.f32 %v222, %v236
    %v247 = vsub.f32 %v224, %v237
    %v248 = vadd.f32 %v244, 1e-05
    %v249 = vadd.f32 %v245, 1e-05
    %v250 = vrsqrt.pop %v248
    %v251 = vmul.f32 %v250, %v248
    %v252 = vmul.f32 %v251, %v250
    %v253 = vmul.f32 0.5, %v252
    %v254 = vsub.f32 1.5, %v253
    %v255 = vmul.f32 %v250, %v254
    %vm256 = vweird.f32 %v248
    %vm257 = vweird.f32 %v250
    %vm258 = vmor %vm256, %vm257
    %v259 = vsel %vm258, %v250, %v255
    %v260 = vrsqrt.pop %v249
    %v261 = vmul.f32 %v260, %v249
    %v262 = vmul.f32 %v261, %v260
    %v263 = vmul.f32 0.5, %v262
    %v264 = vsub.f32 1.5, %v263
    %v265 = vmul.f32 %v260, %v264
    %vm266 = vweird.f32 %v249
    %vm267 = vweird.f32 %v260
    %vm268 = vmor %vm266, %vm267
    %v269 = vsel %vm268, %v260, %v265
    %v270 = vmul.f32 %v246, %v259
    %v271 = vmul.f32 %v247, %v269
    %v272 = vpack.c.bf16 %v270, %v270
    %v273 = vpack.c.bf16 %v271, %v271
    %v274 = vld [vmem:[#allocation5] sm:$0xf]
    %v275 = vld [vmem:[#allocation5 + $0x4] sm:$0xf]
    %v276 = vld [vmem:[#allocation10] sm:$0xf]
    %v277 = vld [vmem:[#allocation10 + $0x4] sm:$0xf]
    %v278 = vld [vmem:[#allocation10 + $0x8] sm:$0xf]
    %v279 = vld [vmem:[#allocation10 + $0xc] sm:$0xf]
    %v280 = vld [vmem:[#allocation10 + $0x10] sm:$0xf]
    %v281 = vld [vmem:[#allocation10 + $0x14] sm:$0xf]
    %v282 = vperm.slane %v176, 0
    %v285 = vunpack.c.l.b16 %v274
    %v286 = vunpack.c.l.b16 %v275
    %v287 = vpack.c.b16 %v286, %v285
    %v294 = vunpack.c.l.b16 %v276
    %v295 = vunpack.c.l.b16 %v277
    %v296 = vunpack.c.l.b16 %v278
    %v297 = vunpack.c.l.b16 %v279
    %v298 = vunpack.c.l.b16 %v280
    %v299 = vunpack.c.l.b16 %v281
    %v300 = vpack.c.b16 %v295, %v294
    %v301 = vpack.c.b16 %v297, %v296
    %v302 = vpack.c.b16 %v299, %v298
    %vm306 = vcmask 392192
    %v308 = vsel %vm306, %v287, 0
    %310 = vmatpush.bf16.msra.mxu0 0
    %311 = vmatpush.bf16.msra.mxu0 0
    %312 = vmatpush.bf16.msra.mxu0 0
    %313 = vmatpush.bf16.msra.mxu0 0
    %314 = vmatpush.bf16.msra.mxu0 0
    %315 = vmatpush.bf16.msra.mxu0 %v302
    %316 = vmatpush.bf16.msra.mxu0 %v301
    %317 = vmatpush.bf16.msra.mxu0 %v300
    %318 = vmatmul.bf16.gmra.mxu0 %v308
    %v319 = vpop.f32.mrf.mxu0
    %v320 = vadd.f32 %v282, %v319
    %v321 = vpop.f32.mrf.mxu0
    %v322 = vadd.f32 %v282, %v321
    %323 = vdwg.mxu0
    %324 = vadd.xlane.f32.xlu0 %v320
    %v325 = vpop.xlane.xlu0 %324
    %326 = vadd.xlane.f32.xlu0 %v322
    %v327 = vpop.xlane.xlu0 %326
    %v328 = vmul.f32 %v320, %v320
    %v329 = vmul.f32 %v322, %v322
    %330 = vadd.xlane.f32.xlu0 %v328
    %v331 = vpop.xlane.xlu0 %330
    %332 = vadd.xlane.f32.xlu0 %v329
    %v333 = vpop.xlane.xlu0 %332
    %v334 = vmul.f32 %v325, 0.0078125
    %v335 = vmul.f32 %v327, 0.0078125
    %v336 = vmul.f32 %v331, 0.0078125
    %v337 = vmul.f32 %v333, 0.0078125
    %v338 = vmul.f32 %v334, %v334
    %v339 = vmul.f32 %v335, %v335
    %v340 = vsub.f32 %v336, %v338
    %v341 = vsub.f32 %v337, %v339
    %v342 = vmax.f32 %v340, 0.0
    %v343 = vmax.f32 %v341, 0.0
    %v344 = vsub.f32 %v320, %v334
    %v345 = vsub.f32 %v322, %v335
    %v346 = vadd.f32 %v342, 1e-05
    %v347 = vadd.f32 %v343, 1e-05
    %v348 = vrsqrt.pop %v346
    %v349 = vmul.f32 %v348, %v346
    %v350 = vmul.f32 %v349, %v348
    %v351 = vmul.f32 0.5, %v350
    %v352 = vsub.f32 1.5, %v351
    %v353 = vmul.f32 %v348, %v352
    %vm354 = vweird.f32 %v346
    %vm355 = vweird.f32 %v348
    %vm356 = vmor %vm354, %vm355
    %v357 = vsel %vm356, %v348, %v353
    %v358 = vrsqrt.pop %v347
    %v359 = vmul.f32 %v358, %v347
    %v360 = vmul.f32 %v359, %v358
    %v361 = vmul.f32 0.5, %v360
    %v362 = vsub.f32 1.5, %v361
    %v363 = vmul.f32 %v358, %v362
    %vm364 = vweird.f32 %v347
    %vm365 = vweird.f32 %v358
    %vm366 = vmor %vm364, %vm365
    %v367 = vsel %vm366, %v358, %v363
    %v368 = vmul.f32 %v344, %v357
    %v369 = vmul.f32 %v345, %v367
    %v370 = vpack.c.bf16 %v368, %v368
    %v371 = vpack.c.bf16 %v369, %v369
    %v372 = vld [vmem:[#allocation7] sm:$0xf]
    %v373 = vld [vmem:[#allocation7 + $0x4] sm:$0xf]
    %v374 = vld [vmem:[#allocation11] sm:$0xf]
    %v375 = vld [vmem:[#allocation11 + $0x4] sm:$0xf]
    %v376 = vld [vmem:[#allocation11 + $0x8] sm:$0xf]
    %v377 = vld [vmem:[#allocation11 + $0xc] sm:$0xf]
    %v378 = vld [vmem:[#allocation11 + $0x10] sm:$0xf]
    %v379 = vld [vmem:[#allocation11 + $0x14] sm:$0xf]
    %v380 = vld [vmem:[#allocation11 + $0x18] sm:$0xf]
    %v381 = vld [vmem:[#allocation11 + $0x1c] sm:$0xf]
    %v382 = vperm.slane %v177, 0
    %v385 = vunpack.c.l.b16 %v372
    %v386 = vunpack.c.l.b16 %v373
    %v387 = vpack.c.b16 %v386, %v385
    %v396 = vunpack.c.l.b16 %v374
    %v397 = vunpack.c.l.b16 %v375
    %v398 = vunpack.c.l.b16 %v376
    %v399 = vunpack.c.l.b16 %v377
    %v400 = vunpack.c.l.b16 %v378
    %v401 = vunpack.c.l.b16 %v379
    %v402 = vunpack.c.l.b16 %v380
    %v403 = vunpack.c.l.b16 %v381
    %v404 = vpack.c.b16 %v397, %v396
    %v405 = vpack.c.b16 %v399, %v398
    %v406 = vpack.c.b16 %v401, %v400
    %v407 = vpack.c.b16 %v403, %v402
    %vm412 = vcmask 523264
    %v414 = vsel %vm412, %v387, 0
    %416 = vmatpush.bf16.msra.mxu0 0
    %417 = vmatpush.bf16.msra.mxu0 0
    %418 = vmatpush.bf16.msra.mxu0 0
    %419 = vmatpush.bf16.msra.mxu0 0
    %420 = vmatpush.bf16.msra.mxu0 %v407
    %421 = vmatpush.bf16.msra.mxu0 %v406
    %422 = vmatpush.bf16.msra.mxu0 %v405
    %423 = vmatpush.bf16.msra.mxu0 %v404
    %424 = vmatmul.bf16.gmra.mxu0 %v414
    %v425 = vpop.f32.mrf.mxu0
    %v426 = vadd.f32 %v382, %v425
    %v427 = vpop.f32.mrf.mxu0
    %v428 = vadd.f32 %v382, %v427
    %429 = vdwg.mxu0
    %430 = vadd.xlane.f32.xlu0 %v426
    %v431 = vpop.xlane.xlu0 %430
    %432 = vadd.xlane.f32.xlu0 %v428
    %v433 = vpop.xlane.xlu0 %432
    %v434 = vmul.f32 %v426, %v426
    %v435 = vmul.f32 %v428, %v428
    %436 = vadd.xlane.f32.xlu0 %v434
    %v437 = vpop.xlane.xlu0 %436
    %438 = vadd.xlane.f32.xlu0 %v435
    %v439 = vpop.xlane.xlu0 %438
    %v440 = vmul.f32 %v431, 0.0078125
    %v441 = vmul.f32 %v433, 0.0078125
    %v442 = vmul.f32 %v437, 0.0078125
    %v443 = vmul.f32 %v439, 0.0078125
    %v444 = vmul.f32 %v440, %v440
    %v445 = vmul.f32 %v441, %v441
    %v446 = vsub.f32 %v442, %v444
    %v447 = vsub.f32 %v443, %v445
    %v448 = vmax.f32 %v446, 0.0
    %v449 = vmax.f32 %v447, 0.0
    %v450 = vsub.f32 %v426, %v440
    %v451 = vsub.f32 %v428, %v441
    %v452 = vadd.f32 %v448, 1e-05
    %v453 = vadd.f32 %v449, 1e-05
    %v454 = vrsqrt.pop %v452
    %v455 = vmul.f32 %v454, %v452
    %v456 = vmul.f32 %v455, %v454
    %v457 = vmul.f32 0.5, %v456
    %v458 = vsub.f32 1.5, %v457
    %v459 = vmul.f32 %v454, %v458
    %vm460 = vweird.f32 %v452
    %vm461 = vweird.f32 %v454
    %vm462 = vmor %vm460, %vm461
    %v463 = vsel %vm462, %v454, %v459
    %v464 = vrsqrt.pop %v453
    %v465 = vmul.f32 %v464, %v453
    %v466 = vmul.f32 %v465, %v464
    %v467 = vmul.f32 0.5, %v466
    %v468 = vsub.f32 1.5, %v467
    %v469 = vmul.f32 %v464, %v468
    %vm470 = vweird.f32 %v453
    %vm471 = vweird.f32 %v464
    %vm472 = vmor %vm470, %vm471
    %v473 = vsel %vm472, %v464, %v469
    %v474 = vmul.f32 %v450, %v463
    %v475 = vmul.f32 %v451, %v473
    %v476 = vpack.c.bf16 %v474, %v474
    %v477 = vpack.c.bf16 %v475, %v475
    %v480 = vunpack.c.l.b16 %v272
    %v481 = vunpack.c.l.b16 %v273
    %v482 = vpack.c.b16 %v481, %v480
    %v486 = vunpack.c.l.b16 %v370
    %v487 = vunpack.c.l.b16 %v371
    %v488 = vpack.c.b16 %v487, %v486
    %v492 = vunpack.c.l.b16 %v476
    %v493 = vunpack.c.l.b16 %v477
    %v494 = vpack.c.b16 %v493, %v492
    %v496 = vld [vmem:[#allocation13] sm:$0xf]
    %v497 = vld [vmem:[#allocation13 + $0x4] sm:$0xf]
    %v498 = vld [vmem:[#allocation13 + $0x8] sm:$0xf]
    %v499 = vld [vmem:[#allocation13 + $0xc] sm:$0xf]
    %v500 = vld [vmem:[#allocation13 + $0x10] sm:$0xf]
    %v501 = vld [vmem:[#allocation13 + $0x14] sm:$0xf]
    %v502 = vld [vmem:[#allocation13 + $0x18] sm:$0xf]
    %v503 = vld [vmem:[#allocation13 + $0x1c] sm:$0xf]
    %v504 = vld [vmem:[#allocation13 + $0x20] sm:$0xf]
    %v505 = vld [vmem:[#allocation13 + $0x24] sm:$0xf]
    %v506 = vld [vmem:[#allocation13 + $0x28] sm:$0xf]
    %v507 = vld [vmem:[#allocation13 + $0x2c] sm:$0xf]
    %v508 = vld [vmem:[#allocation13 + $0x30] sm:$0xf]
    %v509 = vld [vmem:[#allocation13 + $0x34] sm:$0xf]
    %v510 = vld [vmem:[#allocation13 + $0x38] sm:$0xf]
    %v511 = vld [vmem:[#allocation13 + $0x3c] sm:$0xf]
    %v512 = vld [vmem:[#allocation13 + $0x40] sm:$0xf]
    %v513 = vld [vmem:[#allocation13 + $0x44] sm:$0xf]
    %v514 = vld [vmem:[#allocation13 + $0x48] sm:$0xf]
    %v515 = vld [vmem:[#allocation13 + $0x4c] sm:$0xf]
    %v516 = vld [vmem:[#allocation13 + $0x50] sm:$0xf]
    %v517 = vld [vmem:[#allocation13 + $0x54] sm:$0xf]
    %v518 = vld [vmem:[#allocation13 + $0x58] sm:$0xf]
    %v519 = vld [vmem:[#allocation13 + $0x5c] sm:$0xf]
    %v520 = vld [vmem:[#allocation13 + $0x60] sm:$0xf]
    %v521 = vld [vmem:[#allocation13 + $0x64] sm:$0xf]
    %v522 = vld [vmem:[#allocation13 + $0x68] sm:$0xf]
    %v523 = vld [vmem:[#allocation13 + $0x6c] sm:$0xf]
    %v524 = vld [vmem:[#allocation13 + $0x70] sm:$0xf]
    %v525 = vld [vmem:[#allocation13 + $0x74] sm:$0xf]
    %v526 = vld [vmem:[#allocation13 + $0x78] sm:$0xf]
    %v527 = vld [vmem:[#allocation13 + $0x7c] sm:$0xf]
    %v528 = vld [vmem:[#allocation13 + $0x80] sm:$0xf]
    %v529 = vld [vmem:[#allocation13 + $0x84] sm:$0xf]
    %v530 = vld [vmem:[#allocation13 + $0x88] sm:$0xf]
    %v531 = vld [vmem:[#allocation13 + $0x8c] sm:$0xf]
    %v532 = vld [vmem:[#allocation13 + $0x90] sm:$0xf]
    %v533 = vld [vmem:[#allocation13 + $0x94] sm:$0xf]
    %v534 = vld [vmem:[#allocation13 + $0x98] sm:$0xf]
    %v535 = vld [vmem:[#allocation13 + $0x9c] sm:$0xf]
    %v536 = vld [vmem:[#allocation13 + $0xa0] sm:$0xf]
    %v537 = vld [vmem:[#allocation13 + $0xa4] sm:$0xf]
    %v538 = vld [vmem:[#allocation13 + $0xa8] sm:$0xf]
    %v539 = vld [vmem:[#allocation13 + $0xac] sm:$0xf]
    %v540 = vld [vmem:[#allocation13 + $0xb0] sm:$0xf]
    %v541 = vld [vmem:[#allocation13 + $0xb4] sm:$0xf]
    %v542 = vld [vmem:[#allocation13 + $0xb8] sm:$0xf]
    %v543 = vld [vmem:[#allocation13 + $0xbc] sm:$0xf]
    %v544 = vperm.slane %v181, 0
    %v593 = vunpack.c.l.b16 %v496
    %v594 = vunpack.c.l.b16 %v497
    %v595 = vunpack.c.l.b16 %v498
    %v596 = vunpack.c.l.b16 %v499
    %v597 = vunpack.c.l.b16 %v500
    %v598 = vunpack.c.l.b16 %v501
    %v599 = vunpack.c.l.b16 %v502
    %v600 = vunpack.c.l.b16 %v503
    %v601 = vunpack.c.l.b16 %v504
    %v602 = vunpack.c.l.b16 %v505
    %v603 = vunpack.c.l.b16 %v506
    %v604 = vunpack.c.l.b16 %v507
    %v605 = vunpack.c.l.b16 %v508
    %v606 = vunpack.c.l.b16 %v509
    %v607 = vunpack.c.l.b16 %v510
    %v608 = vunpack.c.l.b16 %v511
    %v609 = vunpack.c.l.b16 %v512
    %v610 = vunpack.c.l.b16 %v513
    %v611 = vunpack.c.l.b16 %v514
    %v612 = vunpack.c.l.b16 %v515
    %v613 = vunpack.c.l.b16 %v516
    %v614 = vunpack.c.l.b16 %v517
    %v615 = vunpack.c.l.b16 %v518
    %v616 = vunpack.c.l.b16 %v519
    %v617 = vunpack.c.l.b16 %v520
    %v618 = vunpack.c.l.b16 %v521
    %v619 = vunpack.c.l.b16 %v522
    %v620 = vunpack.c.l.b16 %v523
    %v621 = vunpack.c.l.b16 %v524
    %v622 = vunpack.c.l.b16 %v525
    %v623 = vunpack.c.l.b16 %v526
    %v624 = vunpack.c.l.b16 %v527
    %v625 = vunpack.c.l.b16 %v528
    %v626 = vunpack.c.l.b16 %v529
    %v627 = vunpack.c.l.b16 %v530
    %v628 = vunpack.c.l.b16 %v531
    %v629 = vunpack.c.l.b16 %v532
    %v630 = vunpack.c.l.b16 %v533
    %v631 = vunpack.c.l.b16 %v534
    %v632 = vunpack.c.l.b16 %v535
    %v633 = vunpack.c.l.b16 %v536
    %v634 = vunpack.c.l.b16 %v537
    %v635 = vunpack.c.l.b16 %v538
    %v636 = vunpack.c.l.b16 %v539
    %v637 = vunpack.c.l.b16 %v540
    %v638 = vunpack.c.l.b16 %v541
    %v639 = vunpack.c.l.b16 %v542
    %v640 = vunpack.c.l.b16 %v543
    %v641 = vpack.c.b16 %v594, %v593
    %v642 = vpack.c.b16 %v596, %v595
    %v643 = vpack.c.b16 %v598, %v597
    %v644 = vpack.c.b16 %v600, %v599
    %v645 = vpack.c.b16 %v602, %v601
    %v646 = vpack.c.b16 %v604, %v603
    %v647 = vpack.c.b16 %v606, %v605
    %v648 = vpack.c.b16 %v608, %v607
    %v649 = vpack.c.b16 %v610, %v609
    %v650 = vpack.c.b16 %v612, %v611
    %v651 = vpack.c.b16 %v614, %v613
    %v652 = vpack.c.b16 %v616, %v615
    %v653 = vpack.c.b16 %v618, %v617
    %v654 = vpack.c.b16 %v620, %v619
    %v655 = vpack.c.b16 %v622, %v621
    %v656 = vpack.c.b16 %v624, %v623
    %v657 = vpack.c.b16 %v626, %v625
    %v658 = vpack.c.b16 %v628, %v627
    %v659 = vpack.c.b16 %v630, %v629
    %v660 = vpack.c.b16 %v632, %v631
    %v661 = vpack.c.b16 %v634, %v633
    %v662 = vpack.c.b16 %v636, %v635
    %v663 = vpack.c.b16 %v638, %v637
    %v664 = vpack.c.b16 %v640, %v639
    %689 = vmatpush.bf16.msra.mxu0 %v648
    %690 = vmatpush.bf16.msra.mxu0 %v647
    %691 = vmatpush.bf16.msra.mxu0 %v646
    %692 = vmatpush.bf16.msra.mxu0 %v645
    %693 = vmatpush.bf16.msra.mxu0 %v644
    %694 = vmatpush.bf16.msra.mxu0 %v643
    %695 = vmatpush.bf16.msra.mxu0 %v642
    %696 = vmatpush.bf16.msra.mxu0 %v641
    %697 = vmatmul.bf16.gmra.mxu0 %v482
    %v698 = vpop.f32.mrf.mxu0
    %v699 = vadd.f32 %v544, %v698
    %v700 = vpop.f32.mrf.mxu0
    %v701 = vadd.f32 %v544, %v700
    %702 = vdwg.mxu0
    %703 = vmatpush.bf16.msra.mxu0 %v656
    %704 = vmatpush.bf16.msra.mxu0 %v655
    %705 = vmatpush.bf16.msra.mxu0 %v654
    %706 = vmatpush.bf16.msra.mxu0 %v653
    %707 = vmatpush.bf16.msra.mxu0 %v652
    %708 = vmatpush.bf16.msra.mxu0 %v651
    %709 = vmatpush.bf16.msra.mxu0 %v650
    %710 = vmatpush.bf16.msra.mxu0 %v649
    %711 = vmatmul.bf16.gmra.mxu0 %v488
    %v712 = vpop.f32.mrf.mxu0
    %v713 = vadd.f32 %v699, %v712
    %v714 = vpop.f32.mrf.mxu0
    %v715 = vadd.f32 %v701, %v714
    %716 = vdwg.mxu0
    %717 = vmatpush.bf16.msra.mxu0 %v664
    %718 = vmatpush.bf16.msra.mxu0 %v663
    %719 = vmatpush.bf16.msra.mxu0 %v662
    %720 = vmatpush.bf16.msra.mxu0 %v661
    %721 = vmatpush.bf16.msra.mxu0 %v660
    %722 = vmatpush.bf16.msra.mxu0 %v659
    %723 = vmatpush.bf16.msra.mxu0 %v658
    %724 = vmatpush.bf16.msra.mxu0 %v657
    %725 = vmatmul.bf16.gmra.mxu0 %v494
    %v726 = vpop.f32.mrf.mxu0
    %v727 = vadd.f32 %v713, %v726
    %v728 = vpop.f32.mrf.mxu0
    %v729 = vadd.f32 %v715, %v728
    %730 = vdwg.mxu0
    %731 = vadd.xlane.f32.xlu0 %v727
    %v732 = vpop.xlane.xlu0 %731
    %733 = vadd.xlane.f32.xlu0 %v729
    %v734 = vpop.xlane.xlu0 %733
    %v735 = vmul.f32 %v727, %v727
    %v736 = vmul.f32 %v729, %v729
    %737 = vadd.xlane.f32.xlu0 %v735
    %v738 = vpop.xlane.xlu0 %737
    %739 = vadd.xlane.f32.xlu0 %v736
    %v740 = vpop.xlane.xlu0 %739
    %v741 = vmul.f32 %v732, 0.041666668
    %v742 = vmul.f32 %v734, 0.041666668
    %v743 = vmul.f32 %v738, 0.041666668
    %v744 = vmul.f32 %v740, 0.041666668
    %v745 = vmul.f32 %v741, %v741
    %v746 = vmul.f32 %v742, %v742
    %v747 = vsub.f32 %v743, %v745
    %v748 = vsub.f32 %v744, %v746
    %v749 = vmax.f32 %v747, 0.0
    %v750 = vmax.f32 %v748, 0.0
    %v751 = vsub.f32 %v727, %v741
    %v752 = vsub.f32 %v729, %v742
    %v753 = vadd.f32 %v749, 1e-05
    %v754 = vadd.f32 %v750, 1e-05
    %v755 = vrsqrt.pop %v753
    %v756 = vmul.f32 %v755, %v753
    %v757 = vmul.f32 %v756, %v755
    %v758 = vmul.f32 0.5, %v757
    %v759 = vsub.f32 1.5, %v758
    %v760 = vmul.f32 %v755, %v759
    %vm761 = vweird.f32 %v753
    %vm762 = vweird.f32 %v755
    %vm763 = vmor %vm761, %vm762
    %v764 = vsel %vm763, %v755, %v760
    %v765 = vrsqrt.pop %v754
    %v766 = vmul.f32 %v765, %v754
    %v767 = vmul.f32 %v766, %v765
    %v768 = vmul.f32 0.5, %v767
    %v769 = vsub.f32 1.5, %v768
    %v770 = vmul.f32 %v765, %v769
    %vm771 = vweird.f32 %v754
    %vm772 = vweird.f32 %v765
    %vm773 = vmor %vm771, %vm772
    %v774 = vsel %vm773, %v765, %v770
    %v775 = vmul.f32 %v751, %v764
    %v776 = vmul.f32 %v752, %v774
    %v777 = vperm.slane %v182, 0
    %v778 = vmul.f32 %v775, %v777
    %v779 = vmul.f32 %v776, %v777
    %v780 = vperm.slane %v183, 0
    %v781 = vadd.f32 %v778, %v780
    %v782 = vadd.f32 %v779, %v780
    %v783 = vmul.f32 %v781, 0.5
    %v784 = vmul.f32 %v782, 0.5
    %v785 = vrcp.pop 1.4142135
    %v786 = vmul.f32 1.4142135, %v785
    %v787 = vsub.f32 1.0, %v786
    %v788 = vmul.f32 %v785, %v787
    %v789 = vadd.f32 %v785, %v788
    %vm790 = vweird.f32 %v785
    %v791 = vsel %vm790, %v785, %v789
    %v792 = vmul.f32 %v781, %v791
    %v793 = vmul.f32 %v782, %v791
    %v794 = vmul.f32 %v792, %v792
    %v795 = vmin.f32 16.0, %v794
    %v796 = vmul.f32 %v795, 2.1237322e-06
    %v797 = vadd.f32 %v796, 0.00028619796
    %v798 = vmul.f32 %v795, %v797
    %v799 = vadd.f32 %v798, 0.0036580483
    %v800 = vmul.f32 %v795, %v799
    %v801 = vadd.f32 %v800, 0.05243302
    %v802 = vmul.f32 %v795, %v801
    %v803 = vadd.f32 %v802, 0.18741608
    %v804 = vmul.f32 %v795, %v803
    %v805 = vadd.f32 %v804, 1.1283791
    %v806 = vmul.f32 %v792, %v805
    %v807 = vmul.f32 %v795, 3.8918573e-05
    %v808 = vadd.f32 %v807, 0.001143296
    %v809 = vmul.f32 %v795, %v808
    %v810 = vadd.f32 %v809, 0.014752088
    %v811 = vmul.f32 %v795, %v810
    %v812 = vadd.f32 %v811, 0.112945676
    %v813 = vmul.f32 %v795, %v812
    %v814 = vadd.f32 %v813, 0.4994258
    %v815 = vmul.f32 %v795, %v814
    %v816 = vadd.f32 %v815, 1.0
    %v817 = vrcp.pop %v816
    %v818 = vmul.f32 %v816, %v817
    %v819 = vsub.f32 1.0, %v818
    %v820 = vmul.f32 %v817, %v819
    %v821 = vadd.f32 %v817, %v820
    %vm822 = vweird.f32 %v816
    %vm823 = vweird.f32 %v817
    %vm824 = vmor %vm822, %vm823
    %v825 = vsel %vm824, %v817, %v821
    %v826 = vand.u32 2147483647, %v816
    %vm827 = vcmp.eq.f32.partialorder %v826, 8.507059e+37
    %v828 = vand.u32 %v816, 2147483648
    %v829 = vor.u32 1.1754944e-38, %v828
    %v830 = vsel %vm827, %v829, %v825
    %v831 = vmul.f32 %v806, %v830
    %v832 = vmin.f32 %v831, 1.0
    %v833 = vmax.f32 %v832, -1.0
    %v834 = vmul.f32 %v793, %v793
    %v835 = vmin.f32 16.0, %v834
    %v836 = vmul.f32 %v835, 2.1237322e-06
    %v837 = vadd.f32 %v836, 0.00028619796
    %v838 = vmul.f32 %v835, %v837
    %v839 = vadd.f32 %v838, 0.0036580483
    %v840 = vmul.f32 %v835, %v839
    %v841 = vadd.f32 %v840, 0.05243302
    %v842 = vmul.f32 %v835, %v841
    %v843 = vadd.f32 %v842, 0.18741608
    %v844 = vmul.f32 %v835, %v843
    %v845 = vadd.f32 %v844, 1.1283791
    %v846 = vmul.f32 %v793, %v845
    %v847 = vmul.f32 %v835, 3.8918573e-05
    %v848 = vadd.f32 %v847, 0.001143296
    %v849 = vmul.f32 %v835, %v848
    %v850 = vadd.f32 %v849, 0.014752088
    %v851 = vmul.f32 %v835, %v850
    %v852 = vadd.f32 %v851, 0.112945676
    %v853 = vmul.f32 %v835, %v852
    %v854 = vadd.f32 %v853, 0.4994258
    %v855 = vmul.f32 %v835, %v854
    %v856 = vadd.f32 %v855, 1.0
    %v857 = vrcp.pop %v856
    %v858 = vmul.f32 %v856, %v857
    %v859 = vsub.f32 1.0, %v858
    %v860 = vmul.f32 %v857, %v859
    %v861 = vadd.f32 %v857, %v860
    %vm862 = vweird.f32 %v856
    %vm863 = vweird.f32 %v857
    %vm864 = vmor %vm862, %vm863
    %v865 = vsel %vm864, %v857, %v861
    %v866 = vand.u32 2147483647, %v856
    %vm867 = vcmp.eq.f32.partialorder %v866, 8.507059e+37
    %v868 = vand.u32 %v856, 2147483648
    %v869 = vor.u32 1.1754944e-38, %v868
    %v870 = vsel %vm867, %v869, %v865
    %v871 = vmul.f32 %v846, %v870
    %v872 = vmin.f32 %v871, 1.0
    %v873 = vmax.f32 %v872, -1.0
    %v874 = vadd.f32 %v833, 1.0
    %v875 = vadd.f32 %v873, 1.0
    %v876 = vmul.f32 %v783, %v874
    %v877 = vmul.f32 %v784, %v875
    %v878 = vpack.c.bf16 %v877, %v876
    %v879 = vld [vmem:[#allocation14] sm:$0xf]
    %v880 = vld [vmem:[#allocation14 + $0x4] sm:$0xf]
    %v881 = vld [vmem:[#allocation14 + $0x8] sm:$0xf]
    %v882 = vld [vmem:[#allocation14 + $0xc] sm:$0xf]
    %v883 = vld [vmem:[#allocation14 + $0x10] sm:$0xf]
    %v884 = vld [vmem:[#allocation14 + $0x14] sm:$0xf]
    %v885 = vld [vmem:[#allocation14 + $0x18] sm:$0xf]
    %v886 = vld [vmem:[#allocation14 + $0x1c] sm:$0xf]
    %v887 = vld [vmem:[#allocation14 + $0x20] sm:$0xf]
    %v888 = vld [vmem:[#allocation14 + $0x24] sm:$0xf]
    %v889 = vld [vmem:[#allocation14 + $0x28] sm:$0xf]
    %v890 = vld [vmem:[#allocation14 + $0x2c] sm:$0xf]
    %v891 = vld [vmem:[#allocation14 + $0x30] sm:$0xf]
    %v892 = vld [vmem:[#allocation14 + $0x34] sm:$0xf]
    %v893 = vld [vmem:[#allocation14 + $0x38] sm:$0xf]
    %v894 = vld [vmem:[#allocation14 + $0x3c] sm:$0xf]
    %v895 = vperm.slane %v178, 0
    %v912 = vunpack.c.l.b16 %v879
    %v913 = vunpack.c.l.b16 %v880
    %v914 = vunpack.c.l.b16 %v881
    %v915 = vunpack.c.l.b16 %v882
    %v916 = vunpack.c.l.b16 %v883
    %v917 = vunpack.c.l.b16 %v884
    %v918 = vunpack.c.l.b16 %v885
    %v919 = vunpack.c.l.b16 %v886
    %v920 = vunpack.c.l.b16 %v887
    %v921 = vunpack.c.l.b16 %v888
    %v922 = vunpack.c.l.b16 %v889
    %v923 = vunpack.c.l.b16 %v890
    %v924 = vunpack.c.l.b16 %v891
    %v925 = vunpack.c.l.b16 %v892
    %v926 = vunpack.c.l.b16 %v893
    %v927 = vunpack.c.l.b16 %v894
    %v928 = vpack.c.b16 %v913, %v912
    %v929 = vpack.c.b16 %v915, %v914
    %v930 = vpack.c.b16 %v917, %v916
    %v931 = vpack.c.b16 %v919, %v918
    %v932 = vpack.c.b16 %v921, %v920
    %v933 = vpack.c.b16 %v923, %v922
    %v934 = vpack.c.b16 %v925, %v924
    %v935 = vpack.c.b16 %v927, %v926
    %944 = vmatpush.bf16.msra.mxu0 %v935
    %945 = vmatpush.bf16.msra.mxu0 %v934
    %946 = vmatpush.bf16.msra.mxu0 %v933
    %947 = vmatpush.bf16.msra.mxu0 %v932
    %948 = vmatpush.bf16.msra.mxu0 %v931
    %949 = vmatpush.bf16.msra.mxu0 %v930
    %950 = vmatpush.bf16.msra.mxu0 %v929
    %951 = vmatpush.bf16.msra.mxu0 %v928
    %952 = vmatmul.bf16.gmra.mxu0 %v878
    %v953 = vpop.f32.mrf.mxu0
    %v954 = vadd.f32 %v895, %v953
    %v955 = vpop.f32.mrf.mxu0
    %v956 = vadd.f32 %v895, %v955
    %957 = vdwg.mxu0
    %958 = vadd.xlane.f32.xlu0 %v954
    %v959 = vpop.xlane.xlu0 %958
    %960 = vadd.xlane.f32.xlu0 %v956
    %v961 = vpop.xlane.xlu0 %960
    %v962 = vmul.f32 %v954, %v954
    %v963 = vmul.f32 %v956, %v956
    %964 = vadd.xlane.f32.xlu0 %v962
    %v965 = vpop.xlane.xlu0 %964
    %966 = vadd.xlane.f32.xlu0 %v963
    %v967 = vpop.xlane.xlu0 %966
    %v968 = vmul.f32 %v959, 0.0078125
    %v969 = vmul.f32 %v961, 0.0078125
    %v970 = vmul.f32 %v965, 0.0078125
    %v971 = vmul.f32 %v967, 0.0078125
    %v972 = vmul.f32 %v968, %v968
    %v973 = vmul.f32 %v969, %v969
    %v974 = vsub.f32 %v970, %v972
    %v975 = vsub.f32 %v971, %v973
    %v976 = vmax.f32 %v974, 0.0
    %v977 = vmax.f32 %v975, 0.0
    %v978 = vsub.f32 %v954, %v968
    %v979 = vsub.f32 %v956, %v969
    %v980 = vadd.f32 %v976, 1e-05
    %v981 = vadd.f32 %v977, 1e-05
    %v982 = vrsqrt.pop %v980
    %v983 = vmul.f32 %v982, %v980
    %v984 = vmul.f32 %v983, %v982
    %v985 = vmul.f32 0.5, %v984
    %v986 = vsub.f32 1.5, %v985
    %v987 = vmul.f32 %v982, %v986
    %vm988 = vweird.f32 %v980
    %vm989 = vweird.f32 %v982
    %vm990 = vmor %vm988, %vm989
    %v991 = vsel %vm990, %v982, %v987
    %v992 = vrsqrt.pop %v981
    %v993 = vmul.f32 %v992, %v981
    %v994 = vmul.f32 %v993, %v992
    %v995 = vmul.f32 0.5, %v994
    %v996 = vsub.f32 1.5, %v995
    %v997 = vmul.f32 %v992, %v996
    %vm998 = vweird.f32 %v981
    %vm999 = vweird.f32 %v992
    %vm1000 = vmor %vm998, %vm999
    %v1001 = vsel %vm1000, %v992, %v997
    %v1002 = vmul.f32 %v978, %v991
    %v1003 = vmul.f32 %v979, %v1001
    %v1004 = vperm.slane %v179, 0
    %v1005 = vmul.f32 %v1002, %v1004
    %v1006 = vmul.f32 %v1003, %v1004
    %v1007 = vperm.slane %v180, 0
    %v1008 = vadd.f32 %v1005, %v1007
    %v1009 = vadd.f32 %v1006, %v1007
    %v1010 = vpack.c.bf16 %v1008, %v1008
    %v1011 = vpack.c.bf16 %v1009, %v1009
    %1012 = vst [vmem:[#allocation17] sm:$0xf] %v1010
    %1013 = vst [vmem:[#allocation17 + $0x4] sm:$0xf] %v1011
    // Predicated region
    $region78: #{tpu_custom_call.1} parent=1 // pred_check
      _
    $region79: #{tpu_custom_call.1} parent=1 // pred_check_branch
      %1015 = sbr.rel (0) target = $region81
    $region80: #{tpu_custom_call.1} parent=1 // pred_region
      %1017 = vsyncadd [#allocation4], 0
      %s1018 = sshll.u32 [#allocation17], 4
      %s1019 = int_to_ptr.vmem [resolvable:$true] %s1018
      %s1020 = sshll.u32 %s10, 4
      %s1021 = int_to_ptr.hbm [resolvable:$true] %s1020
      %1026 = dma.vmem_to_hbm [thread:$0]  %s1019, 128, %s1021, [#allocation4], 64, 64, 4
    $region81: #{tpu_custom_call.1} parent=1 // pred_fallthru
      _
    // Predicated region
    $region82: #{tpu_custom_call.1} parent=1 // pred_check
      _
    $region83: #{tpu_custom_call.1} parent=1 // pred_check_branch
      %1028 = sbr.rel (0) target = $region85
    $region84: #{tpu_custom_call.1} parent=1 // pred_region
      %1030 = dma.done [#allocation4], 128
    $region85: #{tpu_custom_call.1} parent=1 // pred_fallthru
      _
    %1031 = vsyncpa [#allocation3], 1
    %1032 = vsyncpa [#allocation6], 1
    %1033 = vsyncpa [#allocation9], 1
    %1034 = vsyncpa [#allocation12], 1
    %1035 = vsyncpa [#allocation15], 1
    %1036 = vsyncpa [#allocation4], 1

</llo_original>
